<compile_context>
chip_gen: v5e
topology: v5e:2x2
jax: 0.10.0
libtpu: 0.0.40
codegen_flags: <defaults>
</compile_context>

<pallas_src>
import numpy as np
import jax
import jax.numpy as jnp
from jax.experimental import pallas as pl
from jax.experimental.pallas import tpu as pltpu


def _round_up(x, m):
    return (x + m - 1) // m * m


def conv2d_pallas(x_nchw, weight_kkio, bias, padding=1):
    """x_nchw: (N, Cin, H, W); weight_kkio: (K, K, Cin, Cout); bias: (Cout,).

    Matches torch.nn.Conv2d(Cin, Cout, kernel_size=K, padding=padding),
    stride=1 (the module's configuration).
    """
    N, Cin, H, W = x_nchw.shape
    K = weight_kkio.shape[0]
    Cout = weight_kkio.shape[3]
    Hp, Wp = H + 2 * padding, W + 2 * padding
    Ho, Wo = Hp - K + 1, Wp - K + 1              # stride-1 output extent
    assert Ho > 0 and Wo > 0, "kernel larger than padded input"
    KKC = K * K * Cin

    NPW = N * Hp * Wp                            # batch folded into lanes
    WPAD = _round_up(NPW, 128)                   # lane-dense output width
    max_off = (K - 1) * Wp + (K - 1)             # largest tap shift
    SRC_W = _round_up(WPAD + max_off, 128)       # lane-dense source width

    # ---- glue (plain JAX): zero-pad + flatten to (Cin, N*Hp*Wp) ------------
    x_pad = jnp.pad(x_nchw, ((0, 0), (0, 0),
                             (padding, padding), (padding, padding)))
    x_flat = jnp.transpose(x_pad, (1, 0, 2, 3)).reshape(Cin, NPW)
    x_flat = jnp.pad(x_flat, ((0, 0), (0, SRC_W - NPW)))       # zero tail

    # Weight as (Cout, K*K*Cin) bf16 with row order (kh, kw, cin); bias column.
    w_mat = jnp.transpose(weight_kkio.reshape(KKC, Cout)).astype(jnp.bfloat16)
    b_col = bias.reshape(Cout, 1).astype(jnp.float32)

    # Static per-tap lane offsets into the flattened padded image.
    offsets = tuple(kh * Wp + kw for kh in range(K) for kw in range(K))

    def kernel(x_ref, w_ref, b_ref, o_ref):
        # x_ref: (Cin, SRC_W)  flattened padded input (batch folded into lanes)
        # w_ref: (Cout, KKC)   bf16 weights, resident
        # b_ref: (Cout, 1)     f32 bias column (broadcasts along lanes)
        # o_ref: (Cout, WPAD)  lane-dense output slab
        # In-register im2col: each tap is a static lane-offset slice (a pure
        # shift on the padded grid) -> one KKC-deep contraction on the MXU.
        slabs = [x_ref[:, d:d + WPAD] for d in offsets]        # K*K x (Cin, WPAD)
        patches = jnp.concatenate(slabs, axis=0)               # (KKC, WPAD) f32
        acc = jnp.dot(w_ref[...], patches.astype(jnp.bfloat16),
                      preferred_element_type=jnp.float32)      # (Cout, WPAD)
        o_ref[...] = (acc + b_ref[...]).astype(o_ref.dtype)

    out_flat = pl.pallas_call(
        kernel,
        out_shape=jax.ShapeDtypeStruct((Cout, WPAD), x_nchw.dtype),
        grid_spec=pltpu.PrefetchScalarGridSpec(
            num_scalar_prefetch=0,
            grid=(1,),                                         # one fat step
            in_specs=[
                pl.BlockSpec((Cin, SRC_W), lambda i: (0, 0)),  # padded input
                pl.BlockSpec((Cout, KKC), lambda i: (0, 0)),   # weights
                pl.BlockSpec((Cout, 1), lambda i: (0, 0)),     # bias
            ],
            out_specs=pl.BlockSpec((Cout, WPAD), lambda i: (0, 0)),
        ),
        compiler_params=pltpu.CompilerParams(
            dimension_semantics=("arbitrary",),
            vmem_limit_bytes=32 * 1024 * 1024,
        ),
    )(x_flat, w_mat, b_col)

    # Drop lane padding / border columns and restore NCHW (few-KB plumbing).
    out = out_flat[:, :NPW].reshape(Cout, N, Hp, Wp)[:, :, :Ho, :Wo]
    return jnp.transpose(out, (1, 0, 2, 3))


if __name__ == "__main__":
    # Module config (small shapes consistent with the forward pass).
    in_features, out_features = 4, 8
    kernel_size, padding = 3, 1
    gain = np.sqrt(2)

    N, H, W = 2, 16, 16

    key = jax.random.PRNGKey(0)
    kx, kw, kb = jax.random.split(key, 3)

    # _initWeight: std = gain / sqrt(prod([k, k, in_features]))
    fan_in = kernel_size * kernel_size * in_features
    std = gain / np.sqrt(fan_in)
    # Weight stored as (K, K, Cin, Cout) (equivalent to the PyTorch
    # (Cout, Cin, K, K) weight under a transpose).
    weight = std * jax.random.normal(
        kw, (kernel_size, kernel_size, in_features, out_features),
        dtype=jnp.float32)
    # nn.Conv2d default bias init: U(-1/sqrt(fan_in), 1/sqrt(fan_in))
    bound = 1.0 / np.sqrt(fan_in)
    bias = jax.random.uniform(kb, (out_features,), minval=-bound, maxval=bound,
                              dtype=jnp.float32)

    x = jax.random.normal(kx, (N, in_features, H, W), dtype=jnp.float32)

    out = conv2d_pallas(x, weight, bias, padding=padding)
    out = jax.block_until_ready(out)

    # Cross-check against XLA's conv (same semantics as torch.nn.Conv2d).
    ref = jax.lax.conv_general_dilated(
        x, jnp.transpose(weight, (3, 2, 0, 1)),  # (Cout, Cin, K, K)
        window_strides=(1, 1),
        padding=((padding, padding), (padding, padding)),
        dimension_numbers=("NCHW", "OIHW", "NCHW"),
    ) + bias[None, :, None, None]

    assert out.shape == (N, out_features, H, W)
    # Tolerance relaxed for the bf16 MXU path (f32 accumulation).
    assert np.allclose(np.asarray(out), np.asarray(ref), atol=5e-2, rtol=5e-2)

    print("KERNEL_OK")
</pallas_src>

<mosaic_0001>
module attributes {stable_mosaic.version = 11 : i64} {
  func.func @kernel(%arg0: i32, %arg1: memref<4x896xf32, #tpu.memory_space<vmem>>, %arg2: memref<8x36xbf16, #tpu.memory_space<vmem>>, %arg3: memref<8x1xf32, #tpu.memory_space<vmem>>, %arg4: memref<8x768xf32, #tpu.memory_space<vmem>>) attributes {dimension_semantics = [#tpu.dimension_semantics<arbitrary>], iteration_bounds = array<i64: 1>, scalar_prefetch = 0 : i64, scratch_operands = 0 : i64, tpu.core_type = #tpu.core_type<tc>, window_params = [{pipeline_mode = #tpu.pipeline_mode<synchronous>, transform_indices = @transform_0, window_bounds = array<i64: 4, 896>}, {pipeline_mode = #tpu.pipeline_mode<synchronous>, transform_indices = @transform_1, window_bounds = array<i64: 8, 36>}, {pipeline_mode = #tpu.pipeline_mode<synchronous>, transform_indices = @transform_2, window_bounds = array<i64: 8, 1>}, {pipeline_mode = #tpu.pipeline_mode<synchronous>, transform_indices = @transform_3, window_bounds = array<i64: 8, 768>}]} {
    %c0 = arith.constant 0 : index
    %c0_0 = arith.constant 0 : index
    %0 = vector.load %arg1[%c0, %c0_0] : memref<4x896xf32, #tpu.memory_space<vmem>>, vector<4x768xf32>
    %c0_1 = arith.constant 0 : index
    %c1 = arith.constant 1 : index
    %1 = vector.load %arg1[%c0_1, %c1] : memref<4x896xf32, #tpu.memory_space<vmem>>, vector<4x768xf32>
    %c0_2 = arith.constant 0 : index
    %c2 = arith.constant 2 : index
    %2 = vector.load %arg1[%c0_2, %c2] : memref<4x896xf32, #tpu.memory_space<vmem>>, vector<4x768xf32>
    %c0_3 = arith.constant 0 : index
    %c18 = arith.constant 18 : index
    %3 = vector.load %arg1[%c0_3, %c18] : memref<4x896xf32, #tpu.memory_space<vmem>>, vector<4x768xf32>
    %c0_4 = arith.constant 0 : index
    %c19 = arith.constant 19 : index
    %4 = vector.load %arg1[%c0_4, %c19] : memref<4x896xf32, #tpu.memory_space<vmem>>, vector<4x768xf32>
    %c0_5 = arith.constant 0 : index
    %c20 = arith.constant 20 : index
    %5 = vector.load %arg1[%c0_5, %c20] : memref<4x896xf32, #tpu.memory_space<vmem>>, vector<4x768xf32>
    %c0_6 = arith.constant 0 : index
    %c36 = arith.constant 36 : index
    %6 = vector.load %arg1[%c0_6, %c36] : memref<4x896xf32, #tpu.memory_space<vmem>>, vector<4x768xf32>
    %c0_7 = arith.constant 0 : index
    %c37 = arith.constant 37 : index
    %7 = vector.load %arg1[%c0_7, %c37] : memref<4x896xf32, #tpu.memory_space<vmem>>, vector<4x768xf32>
    %c0_8 = arith.constant 0 : index
    %c38 = arith.constant 38 : index
    %8 = vector.load %arg1[%c0_8, %c38] : memref<4x896xf32, #tpu.memory_space<vmem>>, vector<4x768xf32>
    %9 = tpu.concatenate %0, %1, %2, %3, %4, %5, %6, %7, %8 in 0 : vector<4x768xf32>, vector<4x768xf32>, vector<4x768xf32>, vector<4x768xf32>, vector<4x768xf32>, vector<4x768xf32>, vector<4x768xf32>, vector<4x768xf32>, vector<4x768xf32> -> vector<36x768xf32>
    %c0_9 = arith.constant 0 : index
    %c0_10 = arith.constant 0 : index
    %10 = vector.load %arg2[%c0_9, %c0_10] : memref<8x36xbf16, #tpu.memory_space<vmem>>, vector<8x36xbf16>
    %11 = arith.truncf %9 : vector<36x768xf32> to vector<36x768xbf16>
    %cst = arith.constant dense<0.000000e+00> : vector<8x768xf32>
    %12 = tpu.matmul %10, %11, %cst {dimension_numbers = #tpu.dot_dimension_numbers<[1], [0], [0], [1], [0, 0, 1, 1], [], []>} : vector<8x36xbf16>, vector<36x768xbf16>, vector<8x768xf32> -> vector<8x768xf32>
    %c0_11 = arith.constant 0 : index
    %c0_12 = arith.constant 0 : index
    %13 = vector.load %arg3[%c0_11, %c0_12] : memref<8x1xf32, #tpu.memory_space<vmem>>, vector<8x1xf32>
    %14 = vector.broadcast %13 : vector<8x1xf32> to vector<8x768xf32>
    %15 = arith.addf %12, %14 : vector<8x768xf32>
    %c0_13 = arith.constant 0 : index
    %c0_14 = arith.constant 0 : index
    %16 = vector.load %arg4[%c0_13, %c0_14] : memref<8x768xf32, #tpu.memory_space<vmem>>, vector<8x768xf32>
    tpu.vector_store %arg4[%c0_13, %c0_14], %15 {strides = array<i32>} : memref<8x768xf32, #tpu.memory_space<vmem>>, vector<8x768xf32>,
    return
  }
  func.func @transform_0(%arg0: i32) -> (i32, i32) {
    %c0_i32 = arith.constant 0 : i32
    %c0_i32_0 = arith.constant 0 : i32
    %c0_i32_1 = arith.constant 0 : i32
    return %c0_i32, %c0_i32_0 : i32, i32
  }
  func.func @transform_1(%arg0: i32) -> (i32, i32) {
    %c0_i32 = arith.constant 0 : i32
    %c0_i32_0 = arith.constant 0 : i32
    %c0_i32_1 = arith.constant 0 : i32
    return %c0_i32, %c0_i32_0 : i32, i32
  }
  func.func @transform_2(%arg0: i32) -> (i32, i32) {
    %c0_i32 = arith.constant 0 : i32
    %c0_i32_0 = arith.constant 0 : i32
    %c0_i32_1 = arith.constant 0 : i32
    return %c0_i32, %c0_i32_0 : i32, i32
  }
  func.func @transform_3(%arg0: i32) -> (i32, i32) {
    %c0_i32 = arith.constant 0 : i32
    %c0_i32_0 = arith.constant 0 : i32
    %c0_i32_1 = arith.constant 0 : i32
    return %c0_i32, %c0_i32_0 : i32, i32
  }
}

</mosaic_0001>

<llo_original>
// kernel: tpu_custom_call.1
$region0: #{tpu_custom_call.1}
  #allocation0 [shape = 'u32[]', space=smem, size = 0x4, offset = 0x4, fixed_abs, tag = 'smem constant byte address 0x4 - core index']
  #allocation1 [shape = 'u32[72,128]{1,0:T(1,128)}', space=vmem, size = 0x9000, scoped, tag = 'internal scratch']
  %s0 = inlined_call_operand.hbm [shape: f32[4,896], index: 0, kind: input, shape index: {}]
  %s1 = inlined_call_operand.vmem [shape: bf16[8,36], index: 1, kind: input, shape index: {}]
  %s2 = inlined_call_operand.vmem [shape: f32[8,1], index: 2, kind: input, shape index: {}]
  %s3 = inlined_call_operand.hbm [shape: f32[8,768], index: 3, kind: output, shape index: {}]
  %s4 = sld [smem:[#allocation0]]
  $region26: #{tpu_custom_call.1} parent=0
    _
  %s6 = ssub.s32 1, %s4
  %s7 = scalar_select 0, %s6, %s4
  $region1: #{tpu_custom_call.1} parent=0
    #allocation2 [shape = 'u8[14336]{0}', space=vmem, size = 0x3800, scoped, tag = 'input window, operand 0, single buffered']
    #allocation3 [shape = 's32[1]{0}', space=sflag, size = 0x4, scoped, tag = 'scoped memory for tpu_custom_call.1']
    #allocation4 [shape = 's32[1]{0}', space=sflag, size = 0x4, scoped, tag = 'scoped memory for tpu_custom_call.1']
    #allocation5 [shape = 'u8[24576]{0}', space=vmem, size = 0x6000, scoped, tag = 'output window, operand 0, single buffered']
    %8 = vsyncpa [#allocation3], 0
    %9 = vsyncpa [#allocation4], 0
    // Predicated region
    $region2: #{tpu_custom_call.1} parent=1 // pred_check
      _
    $region3: #{tpu_custom_call.1} parent=1 // pred_check_branch
      %11 = sbr.rel (0) target = $region5
    $region4: #{tpu_custom_call.1} parent=1 // pred_region
      %13 = vsyncadd [#allocation3], 0
      %s15 = sshll.u32 %s0, 4
      %s16 = int_to_ptr.hbm [resolvable:$true] %s15
      %s17 = sshll.u32 [#allocation2], 4
      %s18 = int_to_ptr.vmem [resolvable:$true] %s17
      %20 = dma.hbm_to_vmem [thread:$0]  %s16, 448, %s18, [#allocation3]
    $region5: #{tpu_custom_call.1} parent=1 // pred_fallthru
      _
    // Predicated region
    $region6: #{tpu_custom_call.1} parent=1 // pred_check
      _
    $region7: #{tpu_custom_call.1} parent=1 // pred_check_branch
      %22 = sbr.rel (0) target = $region9
    $region8: #{tpu_custom_call.1} parent=1 // pred_region
      _
    $region9: #{tpu_custom_call.1} parent=1 // pred_fallthru
      _
    // Predicated region
    $region10: #{tpu_custom_call.1} parent=1 // pred_check
      _
    $region11: #{tpu_custom_call.1} parent=1 // pred_check_branch
      %24 = sbr.rel (0) target = $region13
    $region12: #{tpu_custom_call.1} parent=1 // pred_region
      _
    $region13: #{tpu_custom_call.1} parent=1 // pred_fallthru
      _
    // Predicated region
    $region14: #{tpu_custom_call.1} parent=1 // pred_check
      _
    $region15: #{tpu_custom_call.1} parent=1 // pred_check_branch
      %26 = sbr.rel (0) target = $region17
    $region16: #{tpu_custom_call.1} parent=1 // pred_region
      %28 = dma.done [#allocation3], 448
    $region17: #{tpu_custom_call.1} parent=1 // pred_fallthru
      _
    %v30 = vld [vmem:[#allocation2] sm:$0xff]
    %v31 = vld [vmem:[#allocation2 + $0x8] sm:$0xff]
    %v32 = vld [vmem:[#allocation2 + $0x10] sm:$0xff]
    %v33 = vld [vmem:[#allocation2] sm:$0xff]
    %v34 = vld [vmem:[#allocation2 + $0x8] sm:$0xff]
    %v35 = vld [vmem:[#allocation2 + $0x10] sm:$0xff]
    %v36 = vld [vmem:[#allocation2 + $0x18] sm:$0xf]
    %40 = vst [vmem:[#allocation1] ss:$2 sm:$0xff] %v30
    %s41 = scalar_lea.vmem [#allocation1], 16
    %42 = vst [vmem:[%s41] ss:$2 sm:$0xff] %v31
    %s43 = scalar_lea.vmem [#allocation1], 32
    %44 = vst [vmem:[%s43] ss:$2 sm:$0xff] %v32
    %v45 = vld.sshfl [vmem:[#allocation1] sm:$0xff pattern:$0x75316420]
    %v46 = vld.sshfl [vmem:[#allocation1 + $0x8] sm:$0xff pattern:$0x75316420]
    %v47 = vld.sshfl [vmem:[#allocation1 + $0x10] sm:$0xff pattern:$0x75316420]
    %v48 = vld.sshfl [vmem:[#allocation1 + $0x18] sm:$0xff pattern:$0x75316420]
    %v49 = vld.sshfl [vmem:[#allocation1 + $0x20] sm:$0xff pattern:$0x75316420]
    %v50 = vld.sshfl [vmem:[#allocation1 + $0x28] sm:$0xff pattern:$0x75316420]
    %s61 = scalar_lea.vmem [#allocation1], 1
    %62 = vst [vmem:[%s61] ss:$2 sm:$0xff] %v33
    %s63 = scalar_lea.vmem [#allocation1], 17
    %64 = vst [vmem:[%s63] ss:$2 sm:$0xff] %v34
    %s65 = scalar_lea.vmem [#allocation1], 33
    %66 = vst [vmem:[%s65] ss:$2 sm:$0xff] %v35
    %s67 = scalar_lea.vmem [#allocation1], 49
    %68 = vst [vmem:[%s67] ss:$2 sm:$0xff] %v36
    %v69 = vld.sshfl [vmem:[#allocation1] sm:$0xff pattern:$0x75316420]
    %v70 = vld.sshfl [vmem:[#allocation1 + $0x8] sm:$0xff pattern:$0x75316420]
    %v71 = vld.sshfl [vmem:[#allocation1 + $0x10] sm:$0xff pattern:$0x75316420]
    %v72 = vld.sshfl [vmem:[#allocation1 + $0x18] sm:$0xff pattern:$0x75316420]
    %v73 = vld.sshfl [vmem:[#allocation1 + $0x20] sm:$0xff pattern:$0x75316420]
    %v74 = vld.sshfl [vmem:[#allocation1 + $0x28] sm:$0xff pattern:$0x75316420]
    %v75 = vld.sshfl [vmem:[#allocation1 + $0x30] sm:$0xff pattern:$0x75316420]
    %76 = vrot.lane.b32.xlu0 %v69, 127
    %v77 = vpop.permute.xlu0 %76
    %78 = vrot.lane.b32.xlu0 %v70, 127
    %v79 = vpop.permute.xlu0 %78
    %80 = vrot.lane.b32.xlu0 %v71, 127
    %v81 = vpop.permute.xlu0 %80
    %82 = vrot.lane.b32.xlu0 %v72, 127
    %v83 = vpop.permute.xlu0 %82
    %84 = vrot.lane.b32.xlu0 %v73, 127
    %v85 = vpop.permute.xlu0 %84
    %86 = vrot.lane.b32.xlu0 %v74, 127
    %v87 = vpop.permute.xlu0 %86
    %88 = vrot.lane.b32.xlu0 %v75, 127
    %v89 = vpop.permute.xlu0 %88
    %vm90 = vcmask 1039360
    %v91 = vsel %vm90, %v77, %v79
    %v92 = vsel %vm90, %v79, %v81
    %v93 = vsel %vm90, %v81, %v83
    %v94 = vsel %vm90, %v83, %v85
    %v95 = vsel %vm90, %v85, %v87
    %v96 = vsel %vm90, %v87, %v89
    %103 = vst [vmem:[#allocation1] ss:$2 sm:$0xff] %v33
    %s104 = scalar_lea.vmem [#allocation1], 16
    %105 = vst [vmem:[%s104] ss:$2 sm:$0xff] %v34
    %s106 = scalar_lea.vmem [#allocation1], 32
    %107 = vst [vmem:[%s106] ss:$2 sm:$0xff] %v35
    %s108 = scalar_lea.vmem [#allocation1], 48
    %109 = vst [vmem:[%s108] ss:$2 sm:$0xff] %v36
    %v110 = vld.sshfl [vmem:[#allocation1] sm:$0xff pattern:$0x75316420]
    %v111 = vld.sshfl [vmem:[#allocation1 + $0x8] sm:$0xff pattern:$0x75316420]
    %v112 = vld.sshfl [vmem:[#allocation1 + $0x10] sm:$0xff pattern:$0x75316420]
    %v113 = vld.sshfl [vmem:[#allocation1 + $0x18] sm:$0xff pattern:$0x75316420]
    %v114 = vld.sshfl [vmem:[#allocation1 + $0x20] sm:$0xff pattern:$0x75316420]
    %v115 = vld.sshfl [vmem:[#allocation1 + $0x28] sm:$0xff pattern:$0x75316420]
    %v116 = vld.sshfl [vmem:[#allocation1 + $0x30] sm:$0xff pattern:$0x75316420]
    %117 = vrot.lane.b32.xlu0 %v110, 126
    %v118 = vpop.permute.xlu0 %117
    %119 = vrot.lane.b32.xlu0 %v111, 126
    %v120 = vpop.permute.xlu0 %119
    %121 = vrot.lane.b32.xlu0 %v112, 126
    %v122 = vpop.permute.xlu0 %121
    %123 = vrot.lane.b32.xlu0 %v113, 126
    %v124 = vpop.permute.xlu0 %123
    %125 = vrot.lane.b32.xlu0 %v114, 126
    %v126 = vpop.permute.xlu0 %125
    %127 = vrot.lane.b32.xlu0 %v115, 126
    %v128 = vpop.permute.xlu0 %127
    %129 = vrot.lane.b32.xlu0 %v116, 126
    %v130 = vpop.permute.xlu0 %129
    %vm131 = vcmask 1031168
    %v132 = vsel %vm131, %v118, %v120
    %v133 = vsel %vm131, %v120, %v122
    %v134 = vsel %vm131, %v122, %v124
    %v135 = vsel %vm131, %v124, %v126
    %v136 = vsel %vm131, %v126, %v128
    %v137 = vsel %vm131, %v128, %v130
    %s144 = scalar_lea.vmem [#allocation1], 1
    %145 = vst [vmem:[%s144] ss:$2 sm:$0xff] %v33
    %s146 = scalar_lea.vmem [#allocation1], 17
    %147 = vst [vmem:[%s146] ss:$2 sm:$0xff] %v34
    %s148 = scalar_lea.vmem [#allocation1], 33
    %149 = vst [vmem:[%s148] ss:$2 sm:$0xff] %v35
    %s150 = scalar_lea.vmem [#allocation1], 49
    %151 = vst [vmem:[%s150] ss:$2 sm:$0xff] %v36
    %v152 = vld.sshfl [vmem:[#allocation1] sm:$0xff pattern:$0x75316420]
    %v153 = vld.sshfl [vmem:[#allocation1 + $0x8] sm:$0xff pattern:$0x75316420]
    %v154 = vld.sshfl [vmem:[#allocation1 + $0x10] sm:$0xff pattern:$0x75316420]
    %v155 = vld.sshfl [vmem:[#allocation1 + $0x18] sm:$0xff pattern:$0x75316420]
    %v156 = vld.sshfl [vmem:[#allocation1 + $0x20] sm:$0xff pattern:$0x75316420]
    %v157 = vld.sshfl [vmem:[#allocation1 + $0x28] sm:$0xff pattern:$0x75316420]
    %v158 = vld.sshfl [vmem:[#allocation1 + $0x30] sm:$0xff pattern:$0x75316420]
    %159 = vrot.lane.b32.xlu0 %v152, 110
    %v160 = vpop.permute.xlu0 %159
    %161 = vrot.lane.b32.xlu0 %v153, 110
    %v162 = vpop.permute.xlu0 %161
    %163 = vrot.lane.b32.xlu0 %v154, 110
    %v164 = vpop.permute.xlu0 %163
    %165 = vrot.lane.b32.xlu0 %v155, 110
    %v166 = vpop.permute.xlu0 %165
    %167 = vrot.lane.b32.xlu0 %v156, 110
    %v168 = vpop.permute.xlu0 %167
    %169 = vrot.lane.b32.xlu0 %v157, 110
    %v170 = vpop.permute.xlu0 %169
    %171 = vrot.lane.b32.xlu0 %v158, 110
    %v172 = vpop.permute.xlu0 %171
    %vm173 = vcmask 900096
    %v174 = vsel %vm173, %v160, %v162
    %v175 = vsel %vm173, %v162, %v164
    %v176 = vsel %vm173, %v164, %v166
    %v177 = vsel %vm173, %v166, %v168
    %v178 = vsel %vm173, %v168, %v170
    %v179 = vsel %vm173, %v170, %v172
    %186 = vst [vmem:[#allocation1] ss:$2 sm:$0xff] %v33
    %s187 = scalar_lea.vmem [#allocation1], 16
    %188 = vst [vmem:[%s187] ss:$2 sm:$0xff] %v34
    %s189 = scalar_lea.vmem [#allocation1], 32
    %190 = vst [vmem:[%s189] ss:$2 sm:$0xff] %v35
    %s191 = scalar_lea.vmem [#allocation1], 48
    %192 = vst [vmem:[%s191] ss:$2 sm:$0xff] %v36
    %v193 = vld.sshfl [vmem:[#allocation1] sm:$0xff pattern:$0x75316420]
    %v194 = vld.sshfl [vmem:[#allocation1 + $0x8] sm:$0xff pattern:$0x75316420]
    %v195 = vld.sshfl [vmem:[#allocation1 + $0x10] sm:$0xff pattern:$0x75316420]
    %v196 = vld.sshfl [vmem:[#allocation1 + $0x18] sm:$0xff pattern:$0x75316420]
    %v197 = vld.sshfl [vmem:[#allocation1 + $0x20] sm:$0xff pattern:$0x75316420]
    %v198 = vld.sshfl [vmem:[#allocation1 + $0x28] sm:$0xff pattern:$0x75316420]
    %v199 = vld.sshfl [vmem:[#allocation1 + $0x30] sm:$0xff pattern:$0x75316420]
    %200 = vrot.lane.b32.xlu0 %v193, 109
    %v201 = vpop.permute.xlu0 %200
    %202 = vrot.lane.b32.xlu0 %v194, 109
    %v203 = vpop.permute.xlu0 %202
    %204 = vrot.lane.b32.xlu0 %v195, 109
    %v205 = vpop.permute.xlu0 %204
    %206 = vrot.lane.b32.xlu0 %v196, 109
    %v207 = vpop.permute.xlu0 %206
    %208 = vrot.lane.b32.xlu0 %v197, 109
    %v209 = vpop.permute.xlu0 %208
    %210 = vrot.lane.b32.xlu0 %v198, 109
    %v211 = vpop.permute.xlu0 %210
    %212 = vrot.lane.b32.xlu0 %v199, 109
    %v213 = vpop.permute.xlu0 %212
    %vm214 = vcmask 891904
    %v215 = vsel %vm214, %v201, %v203
    %v216 = vsel %vm214, %v203, %v205
    %v217 = vsel %vm214, %v205, %v207
    %v218 = vsel %vm214, %v207, %v209
    %v219 = vsel %vm214, %v209, %v211
    %v220 = vsel %vm214, %v211, %v213
    %s227 = scalar_lea.vmem [#allocation1], 1
    %228 = vst [vmem:[%s227] ss:$2 sm:$0xff] %v33
    %s229 = scalar_lea.vmem [#allocation1], 17
    %230 = vst [vmem:[%s229] ss:$2 sm:$0xff] %v34
    %s231 = scalar_lea.vmem [#allocation1], 33
    %232 = vst [vmem:[%s231] ss:$2 sm:$0xff] %v35
    %s233 = scalar_lea.vmem [#allocation1], 49
    %234 = vst [vmem:[%s233] ss:$2 sm:$0xff] %v36
    %v235 = vld.sshfl [vmem:[#allocation1] sm:$0xff pattern:$0x75316420]
    %v236 = vld.sshfl [vmem:[#allocation1 + $0x8] sm:$0xff pattern:$0x75316420]
    %v237 = vld.sshfl [vmem:[#allocation1 + $0x10] sm:$0xff pattern:$0x75316420]
    %v238 = vld.sshfl [vmem:[#allocation1 + $0x18] sm:$0xff pattern:$0x75316420]
    %v239 = vld.sshfl [vmem:[#allocation1 + $0x20] sm:$0xff pattern:$0x75316420]
    %v240 = vld.sshfl [vmem:[#allocation1 + $0x28] sm:$0xff pattern:$0x75316420]
    %v241 = vld.sshfl [vmem:[#allocation1 + $0x30] sm:$0xff pattern:$0x75316420]
    %242 = vrot.lane.b32.xlu0 %v235, 108
    %v243 = vpop.permute.xlu0 %242
    %244 = vrot.lane.b32.xlu0 %v236, 108
    %v245 = vpop.permute.xlu0 %244
    %246 = vrot.lane.b32.xlu0 %v237, 108
    %v247 = vpop.permute.xlu0 %246
    %248 = vrot.lane.b32.xlu0 %v238, 108
    %v249 = vpop.permute.xlu0 %248
    %250 = vrot.lane.b32.xlu0 %v239, 108
    %v251 = vpop.permute.xlu0 %250
    %252 = vrot.lane.b32.xlu0 %v240, 108
    %v253 = vpop.permute.xlu0 %252
    %254 = vrot.lane.b32.xlu0 %v241, 108
    %v255 = vpop.permute.xlu0 %254
    %vm256 = vcmask 883712
    %v257 = vsel %vm256, %v243, %v245
    %v258 = vsel %vm256, %v245, %v247
    %v259 = vsel %vm256, %v247, %v249
    %v260 = vsel %vm256, %v249, %v251
    %v261 = vsel %vm256, %v251, %v253
    %v262 = vsel %vm256, %v253, %v255
    %269 = vst [vmem:[#allocation1] ss:$2 sm:$0xff] %v33
    %s270 = scalar_lea.vmem [#allocation1], 16
    %271 = vst [vmem:[%s270] ss:$2 sm:$0xff] %v34
    %s272 = scalar_lea.vmem [#allocation1], 32
    %273 = vst [vmem:[%s272] ss:$2 sm:$0xff] %v35
    %s274 = scalar_lea.vmem [#allocation1], 48
    %275 = vst [vmem:[%s274] ss:$2 sm:$0xff] %v36
    %v276 = vld.sshfl [vmem:[#allocation1] sm:$0xff pattern:$0x75316420]
    %v277 = vld.sshfl [vmem:[#allocation1 + $0x8] sm:$0xff pattern:$0x75316420]
    %v278 = vld.sshfl [vmem:[#allocation1 + $0x10] sm:$0xff pattern:$0x75316420]
    %v279 = vld.sshfl [vmem:[#allocation1 + $0x18] sm:$0xff pattern:$0x75316420]
    %v280 = vld.sshfl [vmem:[#allocation1 + $0x20] sm:$0xff pattern:$0x75316420]
    %v281 = vld.sshfl [vmem:[#allocation1 + $0x28] sm:$0xff pattern:$0x75316420]
    %v282 = vld.sshfl [vmem:[#allocation1 + $0x30] sm:$0xff pattern:$0x75316420]
    %283 = vrot.lane.b32.xlu0 %v276, 92
    %v284 = vpop.permute.xlu0 %283
    %285 = vrot.lane.b32.xlu0 %v277, 92
    %v286 = vpop.permute.xlu0 %285
    %287 = vrot.lane.b32.xlu0 %v278, 92
    %v288 = vpop.permute.xlu0 %287
    %289 = vrot.lane.b32.xlu0 %v279, 92
    %v290 = vpop.permute.xlu0 %289
    %291 = vrot.lane.b32.xlu0 %v280, 92
    %v292 = vpop.permute.xlu0 %291
    %293 = vrot.lane.b32.xlu0 %v281, 92
    %v294 = vpop.permute.xlu0 %293
    %295 = vrot.lane.b32.xlu0 %v282, 92
    %v296 = vpop.permute.xlu0 %295
    %vm297 = vcmask 752640
    %v298 = vsel %vm297, %v284, %v286
    %v299 = vsel %vm297, %v286, %v288
    %v300 = vsel %vm297, %v288, %v290
    %v301 = vsel %vm297, %v290, %v292
    %v302 = vsel %vm297, %v292, %v294
    %v303 = vsel %vm297, %v294, %v296
    %s310 = scalar_lea.vmem [#allocation1], 1
    %311 = vst [vmem:[%s310] ss:$2 sm:$0xff] %v33
    %s312 = scalar_lea.vmem [#allocation1], 17
    %313 = vst [vmem:[%s312] ss:$2 sm:$0xff] %v34
    %s314 = scalar_lea.vmem [#allocation1], 33
    %315 = vst [vmem:[%s314] ss:$2 sm:$0xff] %v35
    %s316 = scalar_lea.vmem [#allocation1], 49
    %317 = vst [vmem:[%s316] ss:$2 sm:$0xff] %v36
    %v318 = vld.sshfl [vmem:[#allocation1] sm:$0xff pattern:$0x75316420]
    %v319 = vld.sshfl [vmem:[#allocation1 + $0x8] sm:$0xff pattern:$0x75316420]
    %v320 = vld.sshfl [vmem:[#allocation1 + $0x10] sm:$0xff pattern:$0x75316420]
    %v321 = vld.sshfl [vmem:[#allocation1 + $0x18] sm:$0xff pattern:$0x75316420]
    %v322 = vld.sshfl [vmem:[#allocation1 + $0x20] sm:$0xff pattern:$0x75316420]
    %v323 = vld.sshfl [vmem:[#allocation1 + $0x28] sm:$0xff pattern:$0x75316420]
    %v324 = vld.sshfl [vmem:[#allocation1 + $0x30] sm:$0xff pattern:$0x75316420]
    %325 = vrot.lane.b32.xlu0 %v318, 91
    %v326 = vpop.permute.xlu0 %325
    %327 = vrot.lane.b32.xlu0 %v319, 91
    %v328 = vpop.permute.xlu0 %327
    %329 = vrot.lane.b32.xlu0 %v320, 91
    %v330 = vpop.permute.xlu0 %329
    %331 = vrot.lane.b32.xlu0 %v321, 91
    %v332 = vpop.permute.xlu0 %331
    %333 = vrot.lane.b32.xlu0 %v322, 91
    %v334 = vpop.permute.xlu0 %333
    %335 = vrot.lane.b32.xlu0 %v323, 91
    %v336 = vpop.permute.xlu0 %335
    %337 = vrot.lane.b32.xlu0 %v324, 91
    %v338 = vpop.permute.xlu0 %337
    %vm339 = vcmask 744448
    %v340 = vsel %vm339, %v326, %v328
    %v341 = vsel %vm339, %v328, %v330
    %v342 = vsel %vm339, %v330, %v332
    %v343 = vsel %vm339, %v332, %v334
    %v344 = vsel %vm339, %v334, %v336
    %v345 = vsel %vm339, %v336, %v338
    %352 = vst [vmem:[#allocation1] ss:$2 sm:$0xff] %v33
    %s353 = scalar_lea.vmem [#allocation1], 16
    %354 = vst [vmem:[%s353] ss:$2 sm:$0xff] %v34
    %s355 = scalar_lea.vmem [#allocation1], 32
    %356 = vst [vmem:[%s355] ss:$2 sm:$0xff] %v35
    %s357 = scalar_lea.vmem [#allocation1], 48
    %358 = vst [vmem:[%s357] ss:$2 sm:$0xff] %v36
    %v359 = vld.sshfl [vmem:[#allocation1] sm:$0xff pattern:$0x75316420]
    %v360 = vld.sshfl [vmem:[#allocation1 + $0x8] sm:$0xff pattern:$0x75316420]
    %v361 = vld.sshfl [vmem:[#allocation1 + $0x10] sm:$0xff pattern:$0x75316420]
    %v362 = vld.sshfl [vmem:[#allocation1 + $0x18] sm:$0xff pattern:$0x75316420]
    %v363 = vld.sshfl [vmem:[#allocation1 + $0x20] sm:$0xff pattern:$0x75316420]
    %v364 = vld.sshfl [vmem:[#allocation1 + $0x28] sm:$0xff pattern:$0x75316420]
    %v365 = vld.sshfl [vmem:[#allocation1 + $0x30] sm:$0xff pattern:$0x75316420]
    %366 = vrot.lane.b32.xlu0 %v359, 90
    %v367 = vpop.permute.xlu0 %366
    %368 = vrot.lane.b32.xlu0 %v360, 90
    %v369 = vpop.permute.xlu0 %368
    %370 = vrot.lane.b32.xlu0 %v361, 90
    %v371 = vpop.permute.xlu0 %370
    %372 = vrot.lane.b32.xlu0 %v362, 90
    %v373 = vpop.permute.xlu0 %372
    %374 = vrot.lane.b32.xlu0 %v363, 90
    %v375 = vpop.permute.xlu0 %374
    %376 = vrot.lane.b32.xlu0 %v364, 90
    %v377 = vpop.permute.xlu0 %376
    %378 = vrot.lane.b32.xlu0 %v365, 90
    %v379 = vpop.permute.xlu0 %378
    %vm380 = vcmask 736256
    %v381 = vsel %vm380, %v367, %v369
    %v382 = vsel %vm380, %v369, %v371
    %v383 = vsel %vm380, %v371, %v373
    %v384 = vsel %vm380, %v373, %v375
    %v385 = vsel %vm380, %v375, %v377
    %v386 = vsel %vm380, %v377, %v379
    %vm393 = vcmask 1043456
    %v394 = vsel %vm393, %v45, %v91
    %v395 = vsel %vm393, %v46, %v92
    %v396 = vsel %vm393, %v47, %v93
    %v397 = vsel %vm393, %v48, %v94
    %v398 = vsel %vm393, %v49, %v95
    %v399 = vsel %vm393, %v50, %v96
    %v400 = vsel %vm393, %v132, %v174
    %v401 = vsel %vm393, %v133, %v175
    %v402 = vsel %vm393, %v134, %v176
    %v403 = vsel %vm393, %v135, %v177
    %v404 = vsel %vm393, %v136, %v178
    %v405 = vsel %vm393, %v137, %v179
    %v406 = vsel %vm393, %v215, %v257
    %v407 = vsel %vm393, %v216, %v258
    %v408 = vsel %vm393, %v217, %v259
    %v409 = vsel %vm393, %v218, %v260
    %v410 = vsel %vm393, %v219, %v261
    %v411 = vsel %vm393, %v220, %v262
    %v412 = vsel %vm393, %v298, %v340
    %v413 = vsel %vm393, %v299, %v341
    %v414 = vsel %vm393, %v300, %v342
    %v415 = vsel %vm393, %v301, %v343
    %v416 = vsel %vm393, %v302, %v344
    %v417 = vsel %vm393, %v303, %v345
    %v418 = vld [vmem:[%s1] sm:$0xf]
    %v419 = vpack.c.bf16 %v400, %v394
    %v420 = vpack.c.bf16 %v401, %v395
    %v421 = vpack.c.bf16 %v402, %v396
    %v422 = vpack.c.bf16 %v403, %v397
    %v423 = vpack.c.bf16 %v404, %v398
    %v424 = vpack.c.bf16 %v405, %v399
    %v425 = vpack.c.bf16 %v412, %v406
    %v426 = vpack.c.bf16 %v413, %v407
    %v427 = vpack.c.bf16 %v414, %v408
    %v428 = vpack.c.bf16 %v415, %v409
    %v429 = vpack.c.bf16 %v416, %v410
    %v430 = vpack.c.bf16 %v417, %v411
    %v431 = vpack.c.bf16 %v381, %v381
    %v432 = vpack.c.bf16 %v382, %v382
    %v433 = vpack.c.bf16 %v383, %v383
    %v434 = vpack.c.bf16 %v384, %v384
    %v435 = vpack.c.bf16 %v385, %v385
    %v436 = vpack.c.bf16 %v386, %v386
    %v437 = vld [vmem:[%s2] sm:$0xff]
    %439 = vset.pattern.permute.xlu0 0
    %440 = vperm.xlu0 %439, %v437
    %v441 = vpop.permute.xlu0 %440
    %vm443 = vcmask 293888
    %v445 = vsel %vm443, %v418, 0
    %vm447 = vcmask 1041408
    %v449 = vsel %vm447, %v431, 0
    %v452 = vsel %vm447, %v432, 0
    %v455 = vsel %vm447, %v433, 0
    %v458 = vsel %vm447, %v434, 0
    %v461 = vsel %vm447, %v435, 0
    %v464 = vsel %vm447, %v436, 0
    %466 = vmatpush.bf16.msra.mxu0 0
    %467 = vmatpush.bf16.msra.mxu0 0
    %468 = vmatpush.bf16.msra.mxu0 0
    %469 = vmatpush.bf16.msra.mxu0 0
    %470 = vmatpush.bf16.msra.mxu0 0
    %471 = vmatpush.bf16.msra.mxu0 %v449
    %472 = vmatpush.bf16.msra.mxu0 %v425
    %473 = vmatpush.bf16.msra.mxu0 %v419
    %474 = vmatmul.bf16.gmra.mxu0 %v445
    %v475 = vpop.f32.mrf.mxu0
    %v476 = vadd.f32 %v441, %v475
    %v477 = vpop.f32.mrf.mxu0
    %478 = vdwg.mxu0
    %479 = vmatpush.bf16.msra.mxu0 0
    %480 = vmatpush.bf16.msra.mxu0 0
    %481 = vmatpush.bf16.msra.mxu0 0
    %482 = vmatpush.bf16.msra.mxu0 0
    %483 = vmatpush.bf16.msra.mxu0 0
    %484 = vmatpush.bf16.msra.mxu0 %v452
    %485 = vmatpush.bf16.msra.mxu0 %v426
    %486 = vmatpush.bf16.msra.mxu0 %v420
    %487 = vmatmul.bf16.gmra.mxu0 %v445
    %v488 = vpop.f32.mrf.mxu0
    %v489 = vadd.f32 %v441, %v488
    %v490 = vpop.f32.mrf.mxu0
    %491 = vdwg.mxu0
    %492 = vmatpush.bf16.msra.mxu0 0
    %493 = vmatpush.bf16.msra.mxu0 0
    %494 = vmatpush.bf16.msra.mxu0 0
    %495 = vmatpush.bf16.msra.mxu0 0
    %496 = vmatpush.bf16.msra.mxu0 0
    %497 = vmatpush.bf16.msra.mxu0 %v455
    %498 = vmatpush.bf16.msra.mxu0 %v427
    %499 = vmatpush.bf16.msra.mxu0 %v421
    %500 = vmatmul.bf16.gmra.mxu0 %v445
    %v501 = vpop.f32.mrf.mxu0
    %v502 = vadd.f32 %v441, %v501
    %v503 = vpop.f32.mrf.mxu0
    %504 = vdwg.mxu0
    %505 = vmatpush.bf16.msra.mxu0 0
    %506 = vmatpush.bf16.msra.mxu0 0
    %507 = vmatpush.bf16.msra.mxu0 0
    %508 = vmatpush.bf16.msra.mxu0 0
    %509 = vmatpush.bf16.msra.mxu0 0
    %510 = vmatpush.bf16.msra.mxu0 %v458
    %511 = vmatpush.bf16.msra.mxu0 %v428
    %512 = vmatpush.bf16.msra.mxu0 %v422
    %513 = vmatmul.bf16.gmra.mxu0 %v445
    %v514 = vpop.f32.mrf.mxu0
    %v515 = vadd.f32 %v441, %v514
    %v516 = vpop.f32.mrf.mxu0
    %517 = vdwg.mxu0
    %518 = vmatpush.bf16.msra.mxu0 0
    %519 = vmatpush.bf16.msra.mxu0 0
    %520 = vmatpush.bf16.msra.mxu0 0
    %521 = vmatpush.bf16.msra.mxu0 0
    %522 = vmatpush.bf16.msra.mxu0 0
    %523 = vmatpush.bf16.msra.mxu0 %v461
    %524 = vmatpush.bf16.msra.mxu0 %v429
    %525 = vmatpush.bf16.msra.mxu0 %v423
    %526 = vmatmul.bf16.gmra.mxu0 %v445
    %v527 = vpop.f32.mrf.mxu0
    %v528 = vadd.f32 %v441, %v527
    %v529 = vpop.f32.mrf.mxu0
    %530 = vdwg.mxu0
    %531 = vmatpush.bf16.msra.mxu0 0
    %532 = vmatpush.bf16.msra.mxu0 0
    %533 = vmatpush.bf16.msra.mxu0 0
    %534 = vmatpush.bf16.msra.mxu0 0
    %535 = vmatpush.bf16.msra.mxu0 0
    %536 = vmatpush.bf16.msra.mxu0 %v464
    %537 = vmatpush.bf16.msra.mxu0 %v430
    %538 = vmatpush.bf16.msra.mxu0 %v424
    %539 = vmatmul.bf16.gmra.mxu0 %v445
    %v540 = vpop.f32.mrf.mxu0
    %v541 = vadd.f32 %v441, %v540
    %v542 = vpop.f32.mrf.mxu0
    %543 = vdwg.mxu0
    %544 = vst [vmem:[#allocation5] sm:$0xff] %v476
    %545 = vst [vmem:[#allocation5 + $0x8] sm:$0xff] %v489
    %546 = vst [vmem:[#allocation5 + $0x10] sm:$0xff] %v502
    %547 = vst [vmem:[#allocation5 + $0x18] sm:$0xff] %v515
    %548 = vst [vmem:[#allocation5 + $0x20] sm:$0xff] %v528
    %549 = vst [vmem:[#allocation5 + $0x28] sm:$0xff] %v541
    // Predicated region
    $region18: #{tpu_custom_call.1} parent=1 // pred_check
      _
    $region19: #{tpu_custom_call.1} parent=1 // pred_check_branch
      %551 = sbr.rel (0) target = $region21
    $region20: #{tpu_custom_call.1} parent=1 // pred_region
      %553 = vsyncadd [#allocation4], 0
      %s555 = sshll.u32 [#allocation5], 4
      %s556 = int_to_ptr.vmem [resolvable:$true] %s555
      %s557 = sshll.u32 %s3, 4
      %s558 = int_to_ptr.hbm [resolvable:$true] %s557
      %560 = dma.vmem_to_hbm [thread:$0]  %s556, 768, %s558, [#allocation4]
    $region21: #{tpu_custom_call.1} parent=1 // pred_fallthru
      _
    // Predicated region
    $region22: #{tpu_custom_call.1} parent=1 // pred_check
      _
    $region23: #{tpu_custom_call.1} parent=1 // pred_check_branch
      %562 = sbr.rel (0) target = $region25
    $region24: #{tpu_custom_call.1} parent=1 // pred_region
      %564 = dma.done [#allocation4], 768
    $region25: #{tpu_custom_call.1} parent=1 // pred_fallthru
      _
    %565 = vsyncpa [#allocation3], 1
    %566 = vsyncpa [#allocation4], 1

</llo_original>
